<compile_context>
chip_gen: v7x
topology: tpu7x:2x2x1
jax: 0.10.0
libtpu: 0.0.40
codegen_flags: <defaults>
</compile_context>

<pallas_src>
import functools

import numpy as np
import jax
import jax.numpy as jnp
from jax import lax
from jax.experimental import pallas as pl
from jax.experimental.pallas import tpu as pltpu


# ----------------------------------------------------------------------------
# Filter construction (matches the PyTorch module's binomial taps).
# ----------------------------------------------------------------------------
def get_filter_1d(filt_size=3):
    taps = {
        1: [1.0],
        2: [1.0, 1.0],
        3: [1.0, 2.0, 1.0],
        4: [1.0, 3.0, 3.0, 1.0],
        5: [1.0, 4.0, 6.0, 4.0, 1.0],
        6: [1.0, 5.0, 10.0, 10.0, 5.0, 1.0],
        7: [1.0, 6.0, 15.0, 20.0, 15.0, 6.0, 1.0],
    }[filt_size]
    a = np.array(taps, dtype=np.float64)
    # 2D filter is outer(a,a)/sum(outer(a,a)) == outer(a/sum, a/sum): separable.
    return (a / a.sum()).astype(np.float64)


def get_filter_np(filt_size=3):
    f1 = get_filter_1d(filt_size)
    return (f1[:, None] * f1[None, :]).astype(np.float32)


_PAD_MODE_NP = {
    "refl": "reflect", "reflect": "reflect",
    "repl": "edge", "replicate": "edge",
    "zero": "constant",
}
_PAD_MODE_KERNEL = {
    "refl": "reflect", "reflect": "reflect",
    "repl": "replicate", "replicate": "replicate",
    "zero": "zero",
}


# ----------------------------------------------------------------------------
# Kernel
# ----------------------------------------------------------------------------
def _blur_downsample_kernel(x_ref, o_ref, pa_ref, pb_ref, *,
                            f1d, stride, p0, p1, pad_mode, tnc, h, w, ho, wo):
    """Pad + separable blur + stride-subsample for one channel block.

    x_ref : (TNC, H, W)   raw (unpadded) input block, NCHW layout (W on lanes)
    o_ref : (TNC, Ho, Wo) output block
    pa_ref: (Hp, W)  f32  per-channel scratch: H-padded input
    pb_ref: (Wp, Ho) f32  per-channel scratch: W-padded, vertically-blurred,
                          *transposed* so W sits on the sublane axis.

    All subsampling strides land on the sublane axis (pl.ds strided reads on
    the second-minor dim), never on the 128-wide lane axis.  Filter taps are
    static Python floats -> unrolled scaled adds on the VPU; the two small 2-D
    transposes go to the XLU, which has slack (kernel is HBM-bound).
    """
    fs = len(f1d)

    def fill_pads(ref, interior_rows):
        # ref rows [p0, p0 + interior_rows) already hold the interior.
        # Write the p0 leading / p1 trailing pad rows (reflect / edge / zero).
        ncols = ref.shape[1]
        if pad_mode == "zero":
            if p0:
                ref[pl.ds(0, p0), :] = jnp.zeros((p0, ncols), jnp.float32)
            if p1:
                ref[pl.ds(p0 + interior_rows, p1), :] = jnp.zeros(
                    (p1, ncols), jnp.float32)
            return
        for i in range(p0):
            src = (p0 + (p0 - i)) if pad_mode == "reflect" else p0
            ref[pl.ds(i, 1), :] = ref[pl.ds(src, 1), :]
        for t in range(p1):
            dst = p0 + interior_rows + t
            if pad_mode == "reflect":
                src = p0 + interior_rows - 2 - t
            else:  # replicate
                src = p0 + interior_rows - 1
            ref[pl.ds(dst, 1), :] = ref[pl.ds(src, 1), :]

    def one_channel(c, carry):
        # ---- vertical pass: pad H (sublane axis), blur + stride (f32) ------
        pa_ref[pl.ds(p0, h), :] = x_ref[c].astype(jnp.float32)
        fill_pads(pa_ref, h)
        tv = f1d[0] * pa_ref[pl.ds(0, ho, stride), :]
        for k in range(1, fs):
            tv = tv + f1d[k] * pa_ref[pl.ds(k, ho, stride), :]
        # ---- horizontal pass: transpose so W sits on sublanes, pad, blur ---
        pb_ref[pl.ds(p0, w), :] = tv.T                      # (W, Ho) f32
        fill_pads(pb_ref, w)
        ov = f1d[0] * pb_ref[pl.ds(0, wo, stride), :]
        for k in range(1, fs):
            ov = ov + f1d[k] * pb_ref[pl.ds(k, wo, stride), :]
        # single cast on the store
        o_ref[c] = ov.T.astype(o_ref.dtype)                 # (Ho, Wo)
        return carry

    lax.fori_loop(0, tnc, one_channel, 0)


# ----------------------------------------------------------------------------
# Wrapper / tiling policy
# ----------------------------------------------------------------------------
def _vmem_capacity_bytes():
    try:
        return int(pltpu.get_tpu_info().vmem_capacity_bytes)
    except Exception:
        return 64 * 1024 * 1024   # conservative (v7x-sized) default


def _choose_channel_block(nc, per_chan_bytes, fixed_bytes, budget_bytes):
    """Largest divisor of NC whose double-buffered block fits the budget while
    keeping >= 8 grid steps if possible (pipelining + v7x megacore), else >= 2,
    else whatever fits.  Returns None if even a single channel does not fit."""
    def fits(d):
        return fixed_bytes + 2 * d * per_chan_bytes <= budget_bytes

    divisors = [d for d in range(1, nc + 1) if nc % d == 0]
    for target_steps in (8, 2, 1):
        cands = [d for d in divisors if fits(d) and nc // d >= target_steps]
        if cands:
            return max(cands)
    return None


def _lax_downsample(x, channels, pad_type="reflect", filt_size=3,
                    stride=2, pad_off=0):
    """Pure-XLA reference / fallback (depthwise conv)."""
    p0 = int(1.0 * (filt_size - 1) / 2) + pad_off
    p1 = int(np.ceil(1.0 * (filt_size - 1) / 2)) + pad_off
    if filt_size == 1:
        if pad_off == 0:
            return x[:, :, ::stride, ::stride]
        xp = jnp.pad(x, ((0, 0), (0, 0), (p0, p1), (p0, p1)),
                     mode=_PAD_MODE_NP[pad_type])
        return xp[:, :, ::stride, ::stride]
    xp = jnp.pad(x, ((0, 0), (0, 0), (p0, p1), (p0, p1)),
                 mode=_PAD_MODE_NP[pad_type])
    filt = jnp.asarray(get_filter_np(filt_size))
    w = jnp.broadcast_to(filt[None, None], (channels, 1, filt_size, filt_size))
    return lax.conv_general_dilated(
        xp, w, window_strides=(stride, stride), padding="VALID",
        dimension_numbers=("NCHW", "OIHW", "NCHW"),
        feature_group_count=channels,
        precision=lax.Precision.HIGHEST,
    )


def downsample(x, channels, pad_type="reflect", filt_size=3, stride=2, pad_off=0):
    """JAX/Pallas equivalent of Downsample.forward (input/output NCHW)."""
    N, C, H, W = x.shape
    assert C == channels

    p0 = int(1.0 * (filt_size - 1) / 2) + pad_off
    p1 = int(np.ceil(1.0 * (filt_size - 1) / 2)) + pad_off

    if filt_size == 1:
        # No blur filter: pure strided subsampling (optionally after padding).
        if pad_off == 0:
            return x[:, :, ::stride, ::stride]
        xp = jnp.pad(x, ((0, 0), (0, 0), (p0, p1), (p0, p1)),
                     mode=_PAD_MODE_NP[pad_type])
        return xp[:, :, ::stride, ::stride]

    NC = N * C
    Hp, Wp = H + p0 + p1, W + p0 + p1
    Ho = (Hp - filt_size) // stride + 1
    Wo = (Wp - filt_size) // stride + 1

    itemsize = x.dtype.itemsize
    # Per-channel HBM-side block bytes (input + output), double-buffered below.
    per_chan = (H * W + Ho * Wo) * itemsize
    # VMEM that does NOT scale with the channel block: the two 2-D scratches
    # plus the in-flight f32 value temporaries of one channel iteration.
    fixed = 4 * (Hp * W + Wp * Ho + H * W + 2 * Ho * W + 2 * Wo * Ho) + (1 << 20)

    vmem_cap = _vmem_capacity_bytes()
    budget = vmem_cap // 4          # ~32 MiB on 128-MiB parts, ~16 MiB on v7x
    tnc = _choose_channel_block(NC, per_chan, fixed, budget)
    if tnc is None:
        # TODO(synk): add an H-halo grid axis (manual DMA) so this extreme
        # small-NC / huge-H*W regime stays in Pallas; fall back to XLA for now.
        return _lax_downsample(x, channels, pad_type, filt_size, stride, pad_off)

    usage = fixed + 2 * tnc * per_chan
    vmem_limit = int(max(32 * 2 ** 20,
                         min(int(0.72 * vmem_cap), 2 * usage + (8 << 20))))

    f1d = tuple(float(v) for v in get_filter_1d(filt_size))
    kern = functools.partial(
        _blur_downsample_kernel, f1d=f1d, stride=stride, p0=p0, p1=p1,
        pad_mode=_PAD_MODE_KERNEL[pad_type], tnc=tnc,
        h=H, w=W, ho=Ho, wo=Wo)

    flops = int(2 * filt_size * NC * (Ho * W + Ho * Wo))
    bytes_accessed = int(NC * (H * W + Ho * Wo) * itemsize)

    x3 = x.reshape(NC, H, W)            # free reshape, NCHW kept end-to-end
    out3 = pl.pallas_call(
        kern,
        out_shape=jax.ShapeDtypeStruct((NC, Ho, Wo), x.dtype),
        grid=(NC // tnc,),
        in_specs=[pl.BlockSpec((tnc, H, W), lambda i: (i, 0, 0))],
        out_specs=pl.BlockSpec((tnc, Ho, Wo), lambda i: (i, 0, 0)),
        scratch_shapes=[pltpu.VMEM((Hp, W), jnp.float32),
                        pltpu.VMEM((Wp, Ho), jnp.float32)],
        compiler_params=pltpu.CompilerParams(
            dimension_semantics=("parallel",),
            vmem_limit_bytes=vmem_limit),
        cost_estimate=pl.CostEstimate(
            flops=flops, transcendentals=0, bytes_accessed=bytes_accessed),
    )(x3)
    return out3.reshape(N, C, Ho, Wo)


downsample_jit = jax.jit(
    downsample,
    static_argnames=("channels", "pad_type", "filt_size", "stride", "pad_off"),
)


# ----------------------------------------------------------------------------
# Self-test
# ----------------------------------------------------------------------------
if __name__ == "__main__":
    key = jax.random.PRNGKey(0)

    def check(x, **kw):
        out = jax.block_until_ready(downsample_jit(x, **kw))
        ref = jax.block_until_ready(_lax_downsample(x, **kw))
        assert out.shape == ref.shape, (out.shape, ref.shape)
        err = float(jnp.max(jnp.abs(out - ref)))
        assert jnp.allclose(out, ref, atol=1e-5, rtol=1e-5), err
        return out

    # Main test: module defaults on a small NCHW input.
    N, C, H, W = 2, 4, 16, 16
    x = jax.random.normal(key, (N, C, H, W), dtype=jnp.float32)
    out = check(x, channels=C, pad_type="reflect", filt_size=3, stride=2)
    assert out.shape == (N, C, H // 2, W // 2), out.shape

    # Odd / non-square spatial dims.
    x2 = jax.random.normal(jax.random.PRNGKey(1), (1, 4, 13, 15), jnp.float32)
    check(x2, channels=4)

    # Larger (5-tap) separable filter.
    check(x, channels=C, pad_type="reflect", filt_size=5, stride=2)

    # Replicate padding.
    check(x, channels=C, pad_type="replicate", filt_size=3, stride=2)

    # Zero padding.
    check(x, channels=C, pad_type="zero", filt_size=3, stride=2)

    print("KERNEL_OK")
</pallas_src>

<mosaic_0001>
module attributes {stable_mosaic.version = 11 : i64} {
  func.func @_blur_downsample_kernel(%arg0: i32, %arg1: memref<1x16x16xf32, #tpu.memory_space<vmem>>, %arg2: memref<1x8x8xf32, #tpu.memory_space<vmem>>, %arg3: memref<18x16xf32, #tpu.memory_space<vmem>>, %arg4: memref<18x8xf32, #tpu.memory_space<vmem>>) attributes {dimension_semantics = [#tpu.dimension_semantics<parallel>], iteration_bounds = array<i64: 8>, scalar_prefetch = 0 : i64, scratch_operands = 2 : i64, tpu.core_type = #tpu.core_type<tc>, window_params = [{transform_indices = @transform_0, window_bounds = array<i64: 1, 16, 16>}, {transform_indices = @transform_1, window_bounds = array<i64: 1, 8, 8>}]} {
    %c0_i32 = arith.constant 0 : i32
    %0 = arith.index_cast %c0_i32 : i32 to index
    %c0 = arith.constant 0 : index
    %c0_0 = arith.constant 0 : index
    %1 = vector.load %arg1[%0, %c0, %c0_0] : memref<1x16x16xf32, #tpu.memory_space<vmem>>, vector<1x16x16xf32>
    %2 = vector.shape_cast %1 : vector<1x16x16xf32> to vector<16x16xf32>
    %c1 = arith.constant 1 : index
    %c0_1 = arith.constant 0 : index
    %3 = vector.load %arg3[%c1, %c0_1] : memref<18x16xf32, #tpu.memory_space<vmem>>, vector<16x16xf32>
    tpu.vector_store %arg3[%c1, %c0_1], %2 {strides = array<i32>} : memref<18x16xf32, #tpu.memory_space<vmem>>, vector<16x16xf32>,
    %c2 = arith.constant 2 : index
    %c0_2 = arith.constant 0 : index
    %4 = vector.load %arg3[%c2, %c0_2] : memref<18x16xf32, #tpu.memory_space<vmem>>, vector<1x16xf32>
    %c0_3 = arith.constant 0 : index
    %c0_4 = arith.constant 0 : index
    %5 = vector.load %arg3[%c0_3, %c0_4] : memref<18x16xf32, #tpu.memory_space<vmem>>, vector<1x16xf32>
    tpu.vector_store %arg3[%c0_3, %c0_4], %4 {strides = array<i32>} : memref<18x16xf32, #tpu.memory_space<vmem>>, vector<1x16xf32>,
    %c15 = arith.constant 15 : index
    %c0_5 = arith.constant 0 : index
    %6 = vector.load %arg3[%c15, %c0_5] : memref<18x16xf32, #tpu.memory_space<vmem>>, vector<1x16xf32>
    %c17 = arith.constant 17 : index
    %c0_6 = arith.constant 0 : index
    %7 = vector.load %arg3[%c17, %c0_6] : memref<18x16xf32, #tpu.memory_space<vmem>>, vector<1x16xf32>
    tpu.vector_store %arg3[%c17, %c0_6], %6 {strides = array<i32>} : memref<18x16xf32, #tpu.memory_space<vmem>>, vector<1x16xf32>,
    %c0_7 = arith.constant 0 : index
    %c0_8 = arith.constant 0 : index
    %8 = tpu.strided_load %arg3[%c0_7, %c0_8] {strides = array<i32: 2, 1>} : memref<18x16xf32, #tpu.memory_space<vmem>>, vector<8x16xf32>
    %cst = arith.constant 2.500000e-01 : f32
    %9 = vector.broadcast %cst : f32 to vector<8x16xf32>
    %10 = arith.mulf %9, %8 : vector<8x16xf32>
    %c1_9 = arith.constant 1 : index
    %c0_10 = arith.constant 0 : index
    %11 = tpu.strided_load %arg3[%c1_9, %c0_10] {strides = array<i32: 2, 1>} : memref<18x16xf32, #tpu.memory_space<vmem>>, vector<8x16xf32>
    %cst_11 = arith.constant 5.000000e-01 : f32
    %12 = vector.broadcast %cst_11 : f32 to vector<8x16xf32>
    %13 = arith.mulf %12, %11 : vector<8x16xf32>
    %14 = arith.addf %10, %13 : vector<8x16xf32>
    %c2_12 = arith.constant 2 : index
    %c0_13 = arith.constant 0 : index
    %15 = tpu.strided_load %arg3[%c2_12, %c0_13] {strides = array<i32: 2, 1>} : memref<18x16xf32, #tpu.memory_space<vmem>>, vector<8x16xf32>
    %cst_14 = arith.constant 2.500000e-01 : f32
    %16 = vector.broadcast %cst_14 : f32 to vector<8x16xf32>
    %17 = arith.mulf %16, %15 : vector<8x16xf32>
    %18 = arith.addf %14, %17 : vector<8x16xf32>
    %19 = tpu.transpose %18, [1, 0] : vector<8x16xf32> -> vector<16x8xf32>
    %c1_15 = arith.constant 1 : index
    %c0_16 = arith.constant 0 : index
    %20 = vector.load %arg4[%c1_15, %c0_16] : memref<18x8xf32, #tpu.memory_space<vmem>>, vector<16x8xf32>
    tpu.vector_store %arg4[%c1_15, %c0_16], %19 {strides = array<i32>} : memref<18x8xf32, #tpu.memory_space<vmem>>, vector<16x8xf32>,
    %c2_17 = arith.constant 2 : index
    %c0_18 = arith.constant 0 : index
    %21 = vector.load %arg4[%c2_17, %c0_18] : memref<18x8xf32, #tpu.memory_space<vmem>>, vector<1x8xf32>
    %c0_19 = arith.constant 0 : index
    %c0_20 = arith.constant 0 : index
    %22 = vector.load %arg4[%c0_19, %c0_20] : memref<18x8xf32, #tpu.memory_space<vmem>>, vector<1x8xf32>
    tpu.vector_store %arg4[%c0_19, %c0_20], %21 {strides = array<i32>} : memref<18x8xf32, #tpu.memory_space<vmem>>, vector<1x8xf32>,
    %c15_21 = arith.constant 15 : index
    %c0_22 = arith.constant 0 : index
    %23 = vector.load %arg4[%c15_21, %c0_22] : memref<18x8xf32, #tpu.memory_space<vmem>>, vector<1x8xf32>
    %c17_23 = arith.constant 17 : index
    %c0_24 = arith.constant 0 : index
    %24 = vector.load %arg4[%c17_23, %c0_24] : memref<18x8xf32, #tpu.memory_space<vmem>>, vector<1x8xf32>
    tpu.vector_store %arg4[%c17_23, %c0_24], %23 {strides = array<i32>} : memref<18x8xf32, #tpu.memory_space<vmem>>, vector<1x8xf32>,
    %c0_25 = arith.constant 0 : index
    %c0_26 = arith.constant 0 : index
    %25 = tpu.strided_load %arg4[%c0_25, %c0_26] {strides = array<i32: 2, 1>} : memref<18x8xf32, #tpu.memory_space<vmem>>, vector<8x8xf32>
    %cst_27 = arith.constant 2.500000e-01 : f32
    %26 = vector.broadcast %cst_27 : f32 to vector<8x8xf32>
    %27 = arith.mulf %26, %25 : vector<8x8xf32>
    %c1_28 = arith.constant 1 : index
    %c0_29 = arith.constant 0 : index
    %28 = tpu.strided_load %arg4[%c1_28, %c0_29] {strides = array<i32: 2, 1>} : memref<18x8xf32, #tpu.memory_space<vmem>>, vector<8x8xf32>
    %cst_30 = arith.constant 5.000000e-01 : f32
    %29 = vector.broadcast %cst_30 : f32 to vector<8x8xf32>
    %30 = arith.mulf %29, %28 : vector<8x8xf32>
    %31 = arith.addf %27, %30 : vector<8x8xf32>
    %c2_31 = arith.constant 2 : index
    %c0_32 = arith.constant 0 : index
    %32 = tpu.strided_load %arg4[%c2_31, %c0_32] {strides = array<i32: 2, 1>} : memref<18x8xf32, #tpu.memory_space<vmem>>, vector<8x8xf32>
    %cst_33 = arith.constant 2.500000e-01 : f32
    %33 = vector.broadcast %cst_33 : f32 to vector<8x8xf32>
    %34 = arith.mulf %33, %32 : vector<8x8xf32>
    %35 = arith.addf %31, %34 : vector<8x8xf32>
    %36 = tpu.transpose %35, [1, 0] : vector<8x8xf32> -> vector<8x8xf32>
    %37 = arith.index_cast %c0_i32 : i32 to index
    %c0_34 = arith.constant 0 : index
    %c0_35 = arith.constant 0 : index
    %38 = vector.load %arg2[%37, %c0_34, %c0_35] : memref<1x8x8xf32, #tpu.memory_space<vmem>>, vector<1x8x8xf32>
    %39 = vector.shape_cast %38 : vector<1x8x8xf32> to vector<8x8xf32>
    %40 = vector.shape_cast %36 : vector<8x8xf32> to vector<1x8x8xf32>
    tpu.vector_store %arg2[%37, %c0_34, %c0_35], %40 {strides = array<i32>} : memref<1x8x8xf32, #tpu.memory_space<vmem>>, vector<1x8x8xf32>,
    %c1_i32 = arith.constant 1 : i32
    return
  }
  func.func @transform_0(%arg0: i32) -> (i32, i32, i32) {
    %c0_i32 = arith.constant 0 : i32
    %c0_i32_0 = arith.constant 0 : i32
    %c0_i32_1 = arith.constant 0 : i32
    return %arg0, %c0_i32, %c0_i32_0 : i32, i32, i32
  }
  func.func @transform_1(%arg0: i32) -> (i32, i32, i32) {
    %c0_i32 = arith.constant 0 : i32
    %c0_i32_0 = arith.constant 0 : i32
    %c0_i32_1 = arith.constant 0 : i32
    return %arg0, %c0_i32, %c0_i32_0 : i32, i32, i32
  }
}

</mosaic_0001>

<llo_original>
// kernel: downsample.1
$region0: #{downsample.1}
  #allocation0 [shape = 'u32[]', space=smem, size = 0x4, offset = 0x4, fixed_abs, tag = 'smem constant byte address 0x4 - core index']
  #allocation1 [shape = 'u32[144,128]{1,0:T(1,128)}', space=vmem, size = 0x12000, scoped, tag = 'internal scratch']
  #allocation2 [shape = 'f32[18,16]{1,0:T(8,128)}', space=vmem, size = 0x3000, scoped, tag = 'scratch operand']
  #allocation3 [shape = 'f32[18,8]{1,0:T(8,128)}', space=vmem, size = 0x3000, scoped, tag = 'scratch operand']
  %s0 = inlined_call_operand.hbm [shape: f32[8,16,16], index: 0, kind: input, shape index: {}]
  %s1 = inlined_call_operand.hbm [shape: f32[8,8,8], index: 1, kind: output, shape index: {}]
  %s2 = sld [smem:[#allocation0]]
  $region41: #{downsample.1} parent=0
    _
  %s4 = ssub.s32 1, %s2
  %s5 = scalar_select 0, %s4, %s2
  $region1: #{downsample.1} parent=0
    #allocation4 [shape = 'u8[16384]{0}', space=vmem, size = 0x4000, scoped, tag = 'input window, operand 0']
    #allocation5 [shape = 's32[2]{0}', space=sflag, size = 0x8, scoped, tag = 'scoped memory for downsample.1']
    #allocation6 [shape = 's32[2]{0}', space=sflag, size = 0x8, scoped, tag = 'scoped memory for downsample.1']
    #allocation7 [shape = 'u8[8192]{0}', space=vmem, size = 0x2000, scoped, tag = 'output window, operand 0']
    %6 = vsyncpa [#allocation5], 0
    %s7 = scalar_lea.sflag [#allocation5], 1
    %8 = vsyncpa %s7, 0
    %9 = vsyncpa [#allocation6], 0
    %s10 = scalar_lea.sflag [#allocation6], 1
    %11 = vsyncpa %s10, 0
    loop: start=0, step=1, limit=10
    $region2: #{downsample.1} parent=1 // loop_pre_header
      _
    $region3: #{downsample.1} parent=1 // loop_header
      %s13 = sphi 0, %s17
      %p14 = scmp.ge.s32.totalorder %s13, 10
      %s23 = sphi 0, %s25
      %s26 = sphi 0, %s23
      %s27 = sphi 0, %s26
      %s43 = sphi 0, %s27
      %s49 = sphi 0, %s51
      %s52 = sphi 0, %s49
      %s53 = sphi 0, %s52
      %s69 = sphi 0, %s53
    $region4: #{downsample.1} parent=1 // loop_header_branch
      %16 = sbr.rel (%p14) target = $region8
    $region5: #{downsample.1} parent=1 // loop_body
      %s18 = ssub.s32 %s13, 1
      %s19 = ssub.s32 %s13, 2
      %s20 = sadd.s32 %s13, 1
      %s21 = ssub.s32 %s13, %s20
      %p22 = scmp.eq.s32.totalorder %s21, 0
      %s24 = sadd.s32 %s23, 1
      %s25 = scalar_select %p22, %s23, %s24
      %p28 = pneg %p22
      %p29 = scmp.eq.s32.totalorder %s13, 7
      %p30 = por %p28, %p29
      %p31 = scmp.ne.s32.totalorder %s23, %s26
      %p32 = scmp.eq.s32.totalorder %s13, 0
      %p33 = por %p31, %p32
      %p34 = scmp.ne.s32.totalorder %s23, %s26
      %p35 = scmp.eq.s32.totalorder %s18, 7
      %p36 = por %p34, %p35
      %p37 = scmp.ne.s32.totalorder %s26, %s27
      %p38 = scmp.eq.s32.totalorder %s18, 0
      %p39 = por %p37, %p38
      %p40 = scmp.ne.s32.totalorder %s26, %s27
      %p41 = scmp.eq.s32.totalorder %s19, 7
      %p42 = por %p40, %p41
      %p44 = scmp.ne.s32.totalorder %s27, %s43
      %p45 = scmp.eq.s32.totalorder %s19, 0
      %p46 = por %p44, %p45
      %s47 = ssub.s32 %s13, %s20
      %p48 = scmp.eq.s32.totalorder %s47, 0
      %s50 = sadd.s32 %s49, 1
      %s51 = scalar_select %p48, %s49, %s50
      %p54 = pneg %p48
      %p55 = scmp.eq.s32.totalorder %s13, 7
      %p56 = por %p54, %p55
      %p57 = scmp.ne.s32.totalorder %s49, %s52
      %p58 = scmp.eq.s32.totalorder %s13, 0
      %p59 = por %p57, %p58
      %p60 = scmp.ne.s32.totalorder %s49, %s52
      %p61 = scmp.eq.s32.totalorder %s18, 7
      %p62 = por %p60, %p61
      %p63 = scmp.ne.s32.totalorder %s52, %s53
      %p64 = scmp.eq.s32.totalorder %s18, 0
      %p65 = por %p63, %p64
      %p66 = scmp.ne.s32.totalorder %s52, %s53
      %p67 = scmp.eq.s32.totalorder %s19, 7
      %p68 = por %p66, %p67
      %p70 = scmp.ne.s32.totalorder %s53, %s69
      %p71 = scmp.eq.s32.totalorder %s19, 0
      %p72 = por %p70, %p71
      %p73 = scmp.le.s32.totalorder 1, %s13
      %p74 = scmp.lt.s32.totalorder %s13, 9
      %p75 = pnand %p73, %p74
      %p76 = pneg %p75
      // Predicated region
      $region9: #{downsample.1} parent=5 // pred_check
        _
      $region10: #{downsample.1} parent=5 // pred_check_branch
        %78 = sbr.rel (%p75) target = $region12
      $region11: #{downsample.1} parent=5 // pred_region
        %s79 = ssub.s32 %s13, 1
      $region12: #{downsample.1} parent=5 // pred_fallthru
        _
      %p80 = scmp.lt.s32.totalorder %s13, 8
      // Predicated region
      $region13: #{downsample.1} parent=5 // pred_check
        %p81 = pneg %p80
      $region14: #{downsample.1} parent=5 // pred_check_branch
        %83 = sbr.rel (%p81) target = $region16
      $region15: #{downsample.1} parent=5 // pred_region
        // Predicated region
        $region17: #{downsample.1} parent=15 // pred_check
          %p84 = pneg %p33
        $region18: #{downsample.1} parent=15 // pred_check_branch
          %86 = sbr.rel (%p84) target = $region20
        $region19: #{downsample.1} parent=15 // pred_region
          %s87 = sand.u32 %s23, 1
          %s88 = scalar_lea.sflag [#allocation5], %s87
          %s89 = sand.u32 %s23, 1
          %s90 = smul.addr %s89, 16
          %s91 = scalar_lea.vmem [#allocation4], %s90
          %s93 = ssub.s32 256, 256
          %94 = vsyncadd %s88, %s93
          %s95 = smul.addr %s13, 2
          %s96 = smul.addr %s95, 128
          %s97 = scalar_lea.hbm %s0, %s96
          %s98 = sshll.u32 %s91, 4
          %s99 = int_to_ptr.vmem [resolvable:$true] %s98
          %104 = dma.hbm_to_vmem [thread:$0]  %s97, 256, %s99, %s88, 128, 128, 8
        $region20: #{downsample.1} parent=15 // pred_fallthru
          _
      $region16: #{downsample.1} parent=5 // pred_fallthru
        _
      %p105 = scmp.le.s32.totalorder 1, %s13
      %p106 = scmp.lt.s32.totalorder %s13, 9
      %p107 = pnand %p105, %p106
      %p108 = pneg %p107
      // Predicated region
      $region21: #{downsample.1} parent=5 // pred_check
        _
      $region22: #{downsample.1} parent=5 // pred_check_branch
        %110 = sbr.rel (%p107) target = $region24
      $region23: #{downsample.1} parent=5 // pred_region
        %s111 = ssub.s32 %s13, 1
        %s112 = sand.u32 %s26, 1
        %s113 = scalar_lea.sflag [#allocation5], %s112
        %s114 = sand.u32 %s26, 1
        %s115 = smul.addr %s114, 16
        %s116 = scalar_lea.vmem [#allocation4], %s115
        // Predicated region
        $region25: #{downsample.1} parent=23 // pred_check
          %p117 = pneg %p39
        $region26: #{downsample.1} parent=23 // pred_check_branch
          %119 = sbr.rel (%p117) target = $region28
        $region27: #{downsample.1} parent=23 // pred_region
          %120 = dma.done %s113, 256
        $region28: #{downsample.1} parent=23 // pred_fallthru
          _
        %s121 = sand.u32 %s26, 1
        %s122 = scalar_lea.sflag [#allocation5], %s121
        %s123 = sand.u32 %s26, 1
        %s124 = smul.addr %s123, 16
        %s125 = scalar_lea.vmem [#allocation4], %s124
        %p126 = pneg %p39
        %p127 = pneg %p36
        %p128 = pneg %p65
        %p129 = pneg %p62
        %s130 = sand.u32 %s52, 1
        %s131 = scalar_lea.sflag [#allocation6], %s130
        %s132 = sand.u32 %s52, 1
        %s133 = smul.addr %s132, 8
        %s134 = scalar_lea.vmem [#allocation7], %s133
        %v135 = vld [vmem:[%s116] sm:$0xff]
        %v136 = vld [vmem:[%s116 + $0x8] sm:$0xff]
        %vm137 = vcmask 130048
        %138 = vst.msk [vmem:[#allocation2 + $0x1] sm:$0xff] %vm137, %v135
        %139 = vst.msk [vmem:[#allocation2 + $0x9] sm:$0xff] %vm137, %v136
        %v140 = vld [vmem:[#allocation2 + $0x2] sm:$0x1]
        %vm141 = vcmask 122880
        %142 = vst.msk [vmem:[#allocation2] sm:$0x1] %vm141, %v140
        %v143 = vld [vmem:[#allocation2 + $0xf] sm:$0x1]
        %144 = vst.msk [vmem:[#allocation2 + $0x11] sm:$0x1] %vm141, %v143
        %v145 = vld [vmem:[#allocation2] ss:$2 sm:$0xff]
        %v146 = vmul.f32 %v145, 0.25
        %s147 = scalar_lea.vmem [#allocation2], 1
        %v148 = vld [vmem:[%s147] ss:$2 sm:$0xff]
        %v149 = vmul.f32 %v148, 0.5
        %v150 = vadd.f32 %v146, %v149
        %s151 = scalar_lea.vmem [#allocation2], 2
        %v152 = vld [vmem:[%s151] ss:$2 sm:$0xff]
        %v153 = vmul.f32 %v152, 0.25
        %v154 = vadd.f32 %v150, %v153
        %155 = vxpose.xlu0.b32.start [1/16] %v154, 128
        %156 = vxpose.xlu0.b32.cont [2/16] 0.0, 128
        %157 = vxpose.xlu0.b32.cont [3/16] 0.0, 128
        %158 = vxpose.xlu0.b32.cont [4/16] 0.0, 128
        %159 = vxpose.xlu0.b32.cont [5/16] 0.0, 128
        %160 = vxpose.xlu0.b32.cont [6/16] 0.0, 128
        %161 = vxpose.xlu0.b32.cont [7/16] 0.0, 128
        %162 = vxpose.xlu0.b32.cont [8/16] 0.0, 128
        %163 = vxpose.xlu0.b32.cont [9/16] 0.0, 128
        %164 = vxpose.xlu0.b32.cont [10/16] 0.0, 128
        %165 = vxpose.xlu0.b32.cont [11/16] 0.0, 128
        %166 = vxpose.xlu0.b32.cont [12/16] 0.0, 128
        %167 = vxpose.xlu0.b32.cont [13/16] 0.0, 128
        %168 = vxpose.xlu0.b32.cont [14/16] 0.0, 128
        %169 = vxpose.xlu0.b32.cont [15/16] 0.0, 128
        %170 = vxpose.xlu0.b32.end [16/16] 0.0, 128
        %v171 = vpop.trf.xlu0
        %v172 = vpop.trf.xlu0
        %v173 = vpop.trf.xlu0
        %v174 = vpop.trf.xlu0
        %v175 = vpop.trf.xlu0
        %v176 = vpop.trf.xlu0
        %v177 = vpop.trf.xlu0
        %v178 = vpop.trf.xlu0
        %v179 = vpop.trf.xlu0
        %v180 = vpop.trf.xlu0
        %v181 = vpop.trf.xlu0
        %v182 = vpop.trf.xlu0
        %v183 = vpop.trf.xlu0
        %v184 = vpop.trf.xlu0
        %v185 = vpop.trf.xlu0
        %v186 = vpop.trf.xlu0
        %vm187 = vcmask 64512
        %188 = vst.msk [vmem:[#allocation3 + $0x1] sm:$0xff] %vm187, %v171
        %189 = vst.msk [vmem:[#allocation3 + $0x9] sm:$0xff] %vm187, %v172
        %v190 = vld [vmem:[#allocation3 + $0x2] sm:$0x1]
        %vm191 = vcmask 57344
        %192 = vst.msk [vmem:[#allocation3] sm:$0x1] %vm191, %v190
        %v193 = vld [vmem:[#allocation3 + $0xf] sm:$0x1]
        %194 = vst.msk [vmem:[#allocation3 + $0x11] sm:$0x1] %vm191, %v193
        %v195 = vld [vmem:[#allocation3] ss:$2 sm:$0xff]
        %v196 = vmul.f32 %v195, 0.25
        %s197 = scalar_lea.vmem [#allocation3], 1
        %v198 = vld [vmem:[%s197] ss:$2 sm:$0xff]
        %v199 = vmul.f32 %v198, 0.5
        %v200 = vadd.f32 %v196, %v199
        %s201 = scalar_lea.vmem [#allocation3], 2
        %v202 = vld [vmem:[%s201] ss:$2 sm:$0xff]
        %v203 = vmul.f32 %v202, 0.25
        %v204 = vadd.f32 %v200, %v203
        %205 = vxpose.xlu0.b32.start [1/16] %v204, 128
        %206 = vxpose.xlu0.b32.cont [2/16] 0.0, 128
        %207 = vxpose.xlu0.b32.cont [3/16] 0.0, 128
        %208 = vxpose.xlu0.b32.cont [4/16] 0.0, 128
        %209 = vxpose.xlu0.b32.cont [5/16] 0.0, 128
        %210 = vxpose.xlu0.b32.cont [6/16] 0.0, 128
        %211 = vxpose.xlu0.b32.cont [7/16] 0.0, 128
        %212 = vxpose.xlu0.b32.cont [8/16] 0.0, 128
        %213 = vxpose.xlu0.b32.cont [9/16] 0.0, 128
        %214 = vxpose.xlu0.b32.cont [10/16] 0.0, 128
        %215 = vxpose.xlu0.b32.cont [11/16] 0.0, 128
        %216 = vxpose.xlu0.b32.cont [12/16] 0.0, 128
        %217 = vxpose.xlu0.b32.cont [13/16] 0.0, 128
        %218 = vxpose.xlu0.b32.cont [14/16] 0.0, 128
        %219 = vxpose.xlu0.b32.cont [15/16] 0.0, 128
        %220 = vxpose.xlu0.b32.end [16/16] 0.0, 128
        %v221 = vpop.trf.xlu0
        %v222 = vpop.trf.xlu0
        %v223 = vpop.trf.xlu0
        %v224 = vpop.trf.xlu0
        %v225 = vpop.trf.xlu0
        %v226 = vpop.trf.xlu0
        %v227 = vpop.trf.xlu0
        %v228 = vpop.trf.xlu0
        %v229 = vpop.trf.xlu0
        %v230 = vpop.trf.xlu0
        %v231 = vpop.trf.xlu0
        %v232 = vpop.trf.xlu0
        %v233 = vpop.trf.xlu0
        %v234 = vpop.trf.xlu0
        %v235 = vpop.trf.xlu0
        %v236 = vpop.trf.xlu0
        %237 = vst.msk [vmem:[%s134] sm:$0xff] %vm187, %v221
        %s238 = sand.u32 %s52, 1
        %s239 = scalar_lea.sflag [#allocation6], %s238
        %s240 = sand.u32 %s52, 1
        %s241 = smul.addr %s240, 8
        %s242 = scalar_lea.vmem [#allocation7], %s241
        // Predicated region
        $region29: #{downsample.1} parent=23 // pred_check
          %p243 = pneg %p62
        $region30: #{downsample.1} parent=23 // pred_check_branch
          %245 = sbr.rel (%p243) target = $region32
        $region31: #{downsample.1} parent=23 // pred_region
          %s247 = ssub.s32 128, 128
          %248 = vsyncadd %s239, %s247
          %s249 = smul.addr %s18, 128
          %s250 = scalar_lea.hbm %s1, %s249
          %s252 = sshll.u32 %s242, 4
          %s253 = int_to_ptr.vmem [resolvable:$true] %s252
          %255 = dma.vmem_to_hbm [thread:$0]  %s253, 128, %s250, %s239
        $region32: #{downsample.1} parent=23 // pred_fallthru
          _
      $region24: #{downsample.1} parent=5 // pred_fallthru
        _
      %p256 = scmp.le.s32.totalorder 2, %s13
      // Predicated region
      $region33: #{downsample.1} parent=5 // pred_check
        %p257 = pneg %p256
      $region34: #{downsample.1} parent=5 // pred_check_branch
        %259 = sbr.rel (%p257) target = $region36
      $region35: #{downsample.1} parent=5 // pred_region
        %s260 = ssub.s32 %s13, 2
        // Predicated region
        $region37: #{downsample.1} parent=35 // pred_check
          %p261 = pneg %p68
        $region38: #{downsample.1} parent=35 // pred_check_branch
          %263 = sbr.rel (%p261) target = $region40
        $region39: #{downsample.1} parent=35 // pred_region
          %s264 = sand.u32 %s53, 1
          %s265 = scalar_lea.sflag [#allocation6], %s264
          %s266 = sand.u32 %s53, 1
          %s267 = smul.addr %s266, 8
          %s268 = scalar_lea.vmem [#allocation7], %s267
          %269 = dma.done %s265, 128
        $region40: #{downsample.1} parent=35 // pred_fallthru
          _
      $region36: #{downsample.1} parent=5 // pred_fallthru
        _
    $region6: #{downsample.1} parent=1 // loop_footer
      %s17 = sadd.s32 1, %s13
    $region7: #{downsample.1} parent=1 // loop_footer_branch
      %12 = sbr.rel target = $region3
    $region8: #{downsample.1} parent=1 // loop_exit
      _
    %270 = vsyncpa [#allocation5], 1
    %s271 = scalar_lea.sflag [#allocation5], 1
    %272 = vsyncpa %s271, 1
    %273 = vsyncpa [#allocation6], 1
    %s274 = scalar_lea.sflag [#allocation6], 1
    %275 = vsyncpa %s274, 1

</llo_original>
